<compile_context>
chip_gen: v6e
topology: v6e:2x2x1
jax: 0.10.0
libtpu: 0.0.40
codegen_flags: <defaults>
</compile_context>

<pallas_src>
import functools

import jax
import jax.numpy as jnp
from jax.experimental import pallas as pl
from jax.experimental.pallas import tpu as pltpu


# ----------------------------------------------------------------------------- kernel
def face_rotate_kernel(x_ref, w1_ref, w2_ref, w3_ref, w4_ref, bias_ref, o_ref):
    """One (batch, token-tile) block: fused rotate_mlp x3 + mean + fusion_mlp.

    Shapes inside the kernel (T = token tile on the lane axis):
      x_ref: (9, T)   w1: (96, 9)  w2: (96, 96)  w3: (64, 96)  w4: (64, 64)
      bias_ref: (96, 4) columns = [b1(96), b2(96), b3(64 pad), b4(64 pad)]
      o_ref: (64, T)
    """
    x = x_ref[...]                                            # (9, T)  f32
    b = bias_ref[...]                                         # (96, 4)

    # layer 1: three permuted copies of conv1 (+BN folded) at once
    h = jnp.dot(w1_ref[...], x, preferred_element_type=jnp.float32) + b[:, 0:1]
    h = jnp.maximum(h, 0.0)                                   # (96, T)
    # layer 2: block-diagonal conv2 (+BN folded), still per-branch
    h = jnp.dot(w2_ref[...], h, preferred_element_type=jnp.float32) + b[:, 1:2]
    h = jnp.maximum(h, 0.0)                                   # (96, T)
    # layer 3: conv3 stacked /3  -> also realizes the (h0+h1+h2)/3 mean
    h = jnp.dot(w3_ref[...], h, preferred_element_type=jnp.float32) + b[0:64, 2:3]
    h = jnp.maximum(h, 0.0)                                   # (64, T)
    # layer 4: conv4 (+BN folded)
    h = jnp.dot(w4_ref[...], h, preferred_element_type=jnp.float32) + b[0:64, 3:4]
    o_ref[...] = jnp.maximum(h, 0.0)                          # (64, T)


# ----------------------------------------------------------------------------- params
def make_params(key):
    """Raw Conv1d/BatchNorm1d parameters matching FaceRotateConvolution.__init__.

    Conv weights stored as (Cout, Cin) (1x1 Conv1d), biases (Cout,).
    BN has gamma/beta and nontrivial running mean/var (eval mode).
    """
    ks = jax.random.split(key, 24)
    p = {}

    def conv(kw, kb, cin, cout):
        w = jax.random.normal(kw, (cout, cin), jnp.float32) * (1.0 / jnp.sqrt(cin))
        b = jax.random.normal(kb, (cout,), jnp.float32) * 0.1
        return w, b

    def bn(kg, kb, km, kv, c):
        g = 1.0 + 0.1 * jax.random.normal(kg, (c,), jnp.float32)
        be = 0.1 * jax.random.normal(kb, (c,), jnp.float32)
        m = 0.05 * jax.random.normal(km, (c,), jnp.float32)
        v = 1.0 + 0.1 * jnp.abs(jax.random.normal(kv, (c,), jnp.float32))
        return g, be, m, v

    p["w1"], p["b1"] = conv(ks[0], ks[1], 6, 32)
    p["g1"], p["be1"], p["m1"], p["v1"] = bn(ks[2], ks[3], ks[4], ks[5], 32)
    p["w2"], p["b2"] = conv(ks[6], ks[7], 32, 32)
    p["g2"], p["be2"], p["m2"], p["v2"] = bn(ks[8], ks[9], ks[10], ks[11], 32)
    p["w3"], p["b3"] = conv(ks[12], ks[13], 32, 64)
    p["g3"], p["be3"], p["m3"], p["v3"] = bn(ks[14], ks[15], ks[16], ks[17], 64)
    p["w4"], p["b4"] = conv(ks[18], ks[19], 64, 64)
    p["g4"], p["be4"], p["m4"], p["v4"] = bn(ks[20], ks[21], ks[22], ks[23], 64)
    return p


def fuse_params(p, eps=1e-5):
    """Fold BN into the convs and fuse the three rotations into stacked weights."""
    def fold(w, b, g, be, m, v):
        s = g / jnp.sqrt(v + eps)                      # (Cout,)
        return w * s[:, None], b * s + (be - m * s)

    w1f, b1f = fold(p["w1"], p["b1"], p["g1"], p["be1"], p["m1"], p["v1"])  # (32,6)
    w2f, b2f = fold(p["w2"], p["b2"], p["g2"], p["be2"], p["m2"], p["v2"])  # (32,32)
    w3f, b3f = fold(p["w3"], p["b3"], p["g3"], p["be3"], p["m3"], p["v3"])  # (64,32)
    w4f, b4f = fold(p["w4"], p["b4"], p["g4"], p["be4"], p["m4"], p["v4"])  # (64,64)

    # layer-1 fusion: place conv1 columns at the 9-wide input-channel positions
    # that each "rotation" selects: [:6], [3:9], [6:9]+[0:3]
    def place(w, idx):
        out = jnp.zeros((w.shape[0], 9), w.dtype)
        return out.at[:, jnp.array(idx)].set(w)

    W1 = jnp.concatenate([place(w1f, [0, 1, 2, 3, 4, 5]),
                          place(w1f, [3, 4, 5, 6, 7, 8]),
                          place(w1f, [6, 7, 8, 0, 1, 2])], axis=0)          # (96, 9)
    B1 = jnp.tile(b1f, 3)                                                   # (96,)

    z32 = jnp.zeros((32, 32), jnp.float32)
    W2 = jnp.concatenate([
        jnp.concatenate([w2f, z32, z32], axis=1),
        jnp.concatenate([z32, w2f, z32], axis=1),
        jnp.concatenate([z32, z32, w2f], axis=1)], axis=0)                  # (96, 96)
    B2 = jnp.tile(b2f, 3)                                                   # (96,)

    W3 = jnp.concatenate([w3f, w3f, w3f], axis=1) / 3.0                     # (64, 96)
    W4 = w4f                                                                # (64, 64)

    bias = jnp.stack([B1, B2,
                      jnp.pad(b3f, (0, 32)),
                      jnp.pad(b4f, (0, 32))], axis=1)                       # (96, 4)
    return {"w1": W1, "w2": W2, "w3": W3, "w4": W4, "bias": bias}


# ----------------------------------------------------------------------------- wrapper
@functools.partial(jax.jit, static_argnames=("tile",))
def face_rotate_convolution(corners, fused, tile=2048):
    """corners: (B, 9, N) float32 (PyTorch NCL). Returns (B, 64, N) float32."""
    B, C, N = corners.shape
    assert C == 9
    lane = 128
    n_aligned = ((N + lane - 1) // lane) * lane
    tile_n = min(tile, n_aligned)                      # lane-aligned token tile
    Np = ((N + tile_n - 1) // tile_n) * tile_n
    x = corners if Np == N else jnp.pad(corners, ((0, 0), (0, 0), (0, Np - N)))

    w1, w2, w3, w4, bias = (fused["w1"], fused["w2"], fused["w3"],
                            fused["w4"], fused["bias"])
    # whole small weights stay resident in VMEM (constant block index)
    weight_specs = [pl.BlockSpec(w.shape, lambda b, n: (0, 0))
                    for w in (w1, w2, w3, w4, bias)]

    out = pl.pallas_call(
        face_rotate_kernel,
        out_shape=jax.ShapeDtypeStruct((B, 64, Np), jnp.float32),
        grid=(B, Np // tile_n),
        in_specs=[pl.BlockSpec((None, 9, tile_n), lambda b, n: (b, 0, n))]
                 + weight_specs,
        out_specs=pl.BlockSpec((None, 64, tile_n), lambda b, n: (b, 0, n)),
        compiler_params=pltpu.CompilerParams(
            dimension_semantics=("parallel", "parallel")),
    )(x, w1, w2, w3, w4, bias)

    return out[:, :, :N]


# ----------------------------------------------------------------------------- reference
def reference(corners, p, eps=1e-5):
    def bn(h, g, be, m, v):
        return ((h - m[None, :, None]) / jnp.sqrt(v[None, :, None] + eps)
                * g[None, :, None] + be[None, :, None])

    def conv(h, w, b):
        return jnp.einsum("oc,bcn->bon", w, h) + b[None, :, None]

    def rot(xr):
        h = jax.nn.relu(bn(conv(xr, p["w1"], p["b1"]),
                           p["g1"], p["be1"], p["m1"], p["v1"]))
        h = jax.nn.relu(bn(conv(h, p["w2"], p["b2"]),
                           p["g2"], p["be2"], p["m2"], p["v2"]))
        return h

    fea = (rot(corners[:, :6]) + rot(corners[:, 3:9]) +
           rot(jnp.concatenate([corners[:, 6:], corners[:, :3]], axis=1))) / 3.0
    h = jax.nn.relu(bn(conv(fea, p["w3"], p["b3"]),
                       p["g3"], p["be3"], p["m3"], p["v3"]))
    h = jax.nn.relu(bn(conv(h, p["w4"], p["b4"]),
                       p["g4"], p["be4"], p["m4"], p["v4"]))
    return h


if __name__ == "__main__":
    key = jax.random.PRNGKey(0)
    k_in, k_par = jax.random.split(key)
    B, N = 2, 64
    corners = jax.random.normal(k_in, (B, 9, N), jnp.float32)
    raw = make_params(k_par)
    fused = fuse_params(raw)

    out = face_rotate_convolution(corners, fused)
    out = jax.block_until_ready(out)

    ref = reference(corners, raw)
    assert out.shape == (B, 64, N)
    assert jnp.allclose(out, ref, atol=1e-4, rtol=1e-4), \
        float(jnp.max(jnp.abs(out - ref)))
    print("KERNEL_OK")
</pallas_src>

<mosaic_0001>
module attributes {stable_mosaic.version = 11 : i64} {
  func.func @face_rotate_kernel(%arg0: i32, %arg1: i32, %arg2: memref<1x9x128xf32, #tpu.memory_space<vmem>>, %arg3: memref<96x9xf32, #tpu.memory_space<vmem>>, %arg4: memref<96x96xf32, #tpu.memory_space<vmem>>, %arg5: memref<64x96xf32, #tpu.memory_space<vmem>>, %arg6: memref<64x64xf32, #tpu.memory_space<vmem>>, %arg7: memref<96x4xf32, #tpu.memory_space<vmem>>, %arg8: memref<1x64x128xf32, #tpu.memory_space<vmem>>) attributes {dimension_semantics = [#tpu.dimension_semantics<parallel>, #tpu.dimension_semantics<parallel>], iteration_bounds = array<i64: 2, 1>, scalar_prefetch = 0 : i64, scratch_operands = 0 : i64, tpu.core_type = #tpu.core_type<tc>, window_params = [{transform_indices = @transform_0, window_bounds = array<i64: 1, 9, 128>}, {pipeline_mode = #tpu.pipeline_mode<synchronous>, transform_indices = @transform_1, window_bounds = array<i64: 96, 9>}, {pipeline_mode = #tpu.pipeline_mode<synchronous>, transform_indices = @transform_2, window_bounds = array<i64: 96, 96>}, {pipeline_mode = #tpu.pipeline_mode<synchronous>, transform_indices = @transform_3, window_bounds = array<i64: 64, 96>}, {pipeline_mode = #tpu.pipeline_mode<synchronous>, transform_indices = @transform_4, window_bounds = array<i64: 64, 64>}, {pipeline_mode = #tpu.pipeline_mode<synchronous>, transform_indices = @transform_5, window_bounds = array<i64: 96, 4>}, {transform_indices = @transform_6, window_bounds = array<i64: 1, 64, 128>}]} {
    %c0 = arith.constant 0 : index
    %c0_0 = arith.constant 0 : index
    %c0_1 = arith.constant 0 : index
    %0 = vector.load %arg2[%c0, %c0_0, %c0_1] : memref<1x9x128xf32, #tpu.memory_space<vmem>>, vector<1x9x128xf32>
    %1 = vector.shape_cast %0 : vector<1x9x128xf32> to vector<9x128xf32>
    %c0_2 = arith.constant 0 : index
    %c0_3 = arith.constant 0 : index
    %2 = vector.load %arg7[%c0_2, %c0_3] : memref<96x4xf32, #tpu.memory_space<vmem>>, vector<96x4xf32>
    %c0_4 = arith.constant 0 : index
    %c0_5 = arith.constant 0 : index
    %3 = vector.load %arg3[%c0_4, %c0_5] : memref<96x9xf32, #tpu.memory_space<vmem>>, vector<96x9xf32>
    %cst = arith.constant dense<0.000000e+00> : vector<96x128xf32>
    %4 = tpu.matmul %3, %1, %cst {dimension_numbers = #tpu.dot_dimension_numbers<[1], [0], [0], [1], [0, 0, 1, 1], [], []>} : vector<96x9xf32>, vector<9x128xf32>, vector<96x128xf32> -> vector<96x128xf32>
    %5 = vector.extract_strided_slice %2 {offsets = [0, 0], sizes = [96, 1], strides = [1, 1]} : vector<96x4xf32> to vector<96x1xf32>
    %6 = vector.broadcast %5 : vector<96x1xf32> to vector<96x128xf32>
    %7 = arith.addf %4, %6 : vector<96x128xf32>
    %cst_6 = arith.constant 0.000000e+00 : f32
    %8 = vector.broadcast %cst_6 : f32 to vector<96x128xf32>
    %9 = arith.maximumf %7, %8 : vector<96x128xf32>
    %c0_7 = arith.constant 0 : index
    %c0_8 = arith.constant 0 : index
    %10 = vector.load %arg4[%c0_7, %c0_8] : memref<96x96xf32, #tpu.memory_space<vmem>>, vector<96x96xf32>
    %cst_9 = arith.constant dense<0.000000e+00> : vector<96x128xf32>
    %11 = tpu.matmul %10, %9, %cst_9 {dimension_numbers = #tpu.dot_dimension_numbers<[1], [0], [0], [1], [0, 0, 1, 1], [], []>} : vector<96x96xf32>, vector<96x128xf32>, vector<96x128xf32> -> vector<96x128xf32>
    %12 = vector.extract_strided_slice %2 {offsets = [0, 1], sizes = [96, 1], strides = [1, 1]} : vector<96x4xf32> to vector<96x1xf32>
    %13 = vector.broadcast %12 : vector<96x1xf32> to vector<96x128xf32>
    %14 = arith.addf %11, %13 : vector<96x128xf32>
    %cst_10 = arith.constant 0.000000e+00 : f32
    %15 = vector.broadcast %cst_10 : f32 to vector<96x128xf32>
    %16 = arith.maximumf %14, %15 : vector<96x128xf32>
    %c0_11 = arith.constant 0 : index
    %c0_12 = arith.constant 0 : index
    %17 = vector.load %arg5[%c0_11, %c0_12] : memref<64x96xf32, #tpu.memory_space<vmem>>, vector<64x96xf32>
    %cst_13 = arith.constant dense<0.000000e+00> : vector<64x128xf32>
    %18 = tpu.matmul %17, %16, %cst_13 {dimension_numbers = #tpu.dot_dimension_numbers<[1], [0], [0], [1], [0, 0, 1, 1], [], []>} : vector<64x96xf32>, vector<96x128xf32>, vector<64x128xf32> -> vector<64x128xf32>
    %19 = vector.extract_strided_slice %2 {offsets = [0, 2], sizes = [64, 1], strides = [1, 1]} : vector<96x4xf32> to vector<64x1xf32>
    %20 = vector.broadcast %19 : vector<64x1xf32> to vector<64x128xf32>
    %21 = arith.addf %18, %20 : vector<64x128xf32>
    %cst_14 = arith.constant 0.000000e+00 : f32
    %22 = vector.broadcast %cst_14 : f32 to vector<64x128xf32>
    %23 = arith.maximumf %21, %22 : vector<64x128xf32>
    %c0_15 = arith.constant 0 : index
    %c0_16 = arith.constant 0 : index
    %24 = vector.load %arg6[%c0_15, %c0_16] : memref<64x64xf32, #tpu.memory_space<vmem>>, vector<64x64xf32>
    %cst_17 = arith.constant dense<0.000000e+00> : vector<64x128xf32>
    %25 = tpu.matmul %24, %23, %cst_17 {dimension_numbers = #tpu.dot_dimension_numbers<[1], [0], [0], [1], [0, 0, 1, 1], [], []>} : vector<64x64xf32>, vector<64x128xf32>, vector<64x128xf32> -> vector<64x128xf32>
    %26 = vector.extract_strided_slice %2 {offsets = [0, 3], sizes = [64, 1], strides = [1, 1]} : vector<96x4xf32> to vector<64x1xf32>
    %27 = vector.broadcast %26 : vector<64x1xf32> to vector<64x128xf32>
    %28 = arith.addf %25, %27 : vector<64x128xf32>
    %cst_18 = arith.constant 0.000000e+00 : f32
    %29 = vector.broadcast %cst_18 : f32 to vector<64x128xf32>
    %30 = arith.maximumf %28, %29 : vector<64x128xf32>
    %c0_19 = arith.constant 0 : index
    %c0_20 = arith.constant 0 : index
    %c0_21 = arith.constant 0 : index
    %31 = vector.load %arg8[%c0_19, %c0_20, %c0_21] : memref<1x64x128xf32, #tpu.memory_space<vmem>>, vector<1x64x128xf32>
    %32 = vector.shape_cast %31 : vector<1x64x128xf32> to vector<64x128xf32>
    %33 = vector.shape_cast %30 : vector<64x128xf32> to vector<1x64x128xf32>
    tpu.vector_store %arg8[%c0_19, %c0_20, %c0_21], %33 {strides = array<i32>} : memref<1x64x128xf32, #tpu.memory_space<vmem>>, vector<1x64x128xf32>,
    return
  }
  func.func @transform_0(%arg0: i32, %arg1: i32) -> (i32, i32, i32) {
    %c0_i32 = arith.constant 0 : i32
    %c0_i32_0 = arith.constant 0 : i32
    return %arg0, %c0_i32, %arg1 : i32, i32, i32
  }
  func.func @transform_1(%arg0: i32, %arg1: i32) -> (i32, i32) {
    %c0_i32 = arith.constant 0 : i32
    %c0_i32_0 = arith.constant 0 : i32
    %c0_i32_1 = arith.constant 0 : i32
    return %c0_i32, %c0_i32_0 : i32, i32
  }
  func.func @transform_2(%arg0: i32, %arg1: i32) -> (i32, i32) {
    %c0_i32 = arith.constant 0 : i32
    %c0_i32_0 = arith.constant 0 : i32
    %c0_i32_1 = arith.constant 0 : i32
    return %c0_i32, %c0_i32_0 : i32, i32
  }
  func.func @transform_3(%arg0: i32, %arg1: i32) -> (i32, i32) {
    %c0_i32 = arith.constant 0 : i32
    %c0_i32_0 = arith.constant 0 : i32
    %c0_i32_1 = arith.constant 0 : i32
    return %c0_i32, %c0_i32_0 : i32, i32
  }
  func.func @transform_4(%arg0: i32, %arg1: i32) -> (i32, i32) {
    %c0_i32 = arith.constant 0 : i32
    %c0_i32_0 = arith.constant 0 : i32
    %c0_i32_1 = arith.constant 0 : i32
    return %c0_i32, %c0_i32_0 : i32, i32
  }
  func.func @transform_5(%arg0: i32, %arg1: i32) -> (i32, i32) {
    %c0_i32 = arith.constant 0 : i32
    %c0_i32_0 = arith.constant 0 : i32
    %c0_i32_1 = arith.constant 0 : i32
    return %c0_i32, %c0_i32_0 : i32, i32
  }
  func.func @transform_6(%arg0: i32, %arg1: i32) -> (i32, i32, i32) {
    %c0_i32 = arith.constant 0 : i32
    %c0_i32_0 = arith.constant 0 : i32
    return %arg0, %c0_i32, %arg1 : i32, i32, i32
  }
}

</mosaic_0001>

<llo_original>
// kernel: face_rotate_convolution.1
$region0: #{face_rotate_convolution.1}
  #allocation0 [shape = 'u32[]', space=smem, size = 0x4, offset = 0x4, fixed_abs, tag = 'smem constant byte address 0x4 - core index']
  #allocation1 [shape = 'u32[144,128]{1,0:T(1,128)}', space=vmem, size = 0x12000, scoped, tag = 'internal scratch']
  %s0 = inlined_call_operand.vmem [shape: f32[2,9,128], index: 0, kind: input, shape index: {}]
  %s1 = inlined_call_operand.vmem [shape: f32[96,9], index: 1, kind: input, shape index: {}]
  %s2 = inlined_call_operand.vmem [shape: f32[96,96], index: 2, kind: input, shape index: {}]
  %s3 = inlined_call_operand.vmem [shape: f32[64,96], index: 3, kind: input, shape index: {}]
  %s4 = inlined_call_operand.vmem [shape: f32[64,64], index: 4, kind: input, shape index: {}]
  %s5 = inlined_call_operand.vmem [shape: f32[96,4], index: 5, kind: input, shape index: {}]
  %s6 = inlined_call_operand.hbm [shape: f32[2,64,128], index: 6, kind: output, shape index: {}]
  %s7 = sld [smem:[#allocation0]]
  $region57: #{face_rotate_convolution.1} parent=0
    _
  %s9 = ssub.s32 1, %s7
  %s10 = scalar_select 0, %s9, %s7
  $region1: #{face_rotate_convolution.1} parent=0
    #allocation2 [shape = 'u8[65536]{0}', space=vmem, size = 0x10000, scoped, tag = 'output window, operand 0']
    #allocation3 [shape = 's32[2]{0}', space=sflag, size = 0x8, scoped, tag = 'scoped memory for face_rotate_convolution.1']
    %11 = vsyncpa [#allocation3], 0
    %s12 = scalar_lea.sflag [#allocation3], 1
    %13 = vsyncpa %s12, 0
    loop: start=0, step=1, limit=4
    $region2: #{face_rotate_convolution.1} parent=1 // loop_pre_header
      _
    $region3: #{face_rotate_convolution.1} parent=1 // loop_header
      %s15 = sphi 0, %s19
      %p16 = scmp.ge.s32.totalorder %s15, 4
      %s22 = sphi 0, %s34
      %s23 = sphi 0, %s30
      %s24 = sphi 0, %s22
      %s25 = sphi 0, %s23
      %s26 = sphi 0, %s24
      %s27 = sphi 0, %s25
      %s39 = sphi 0, %s41
      %s42 = sphi 0, %s39
      %s43 = sphi 0, %s42
      %s59 = sphi 0, %s43
      %s63 = sphi 0, %s63
      %s65 = sphi 0, %s63
      %s66 = sphi 0, %s65
      %s80 = sphi 0, %s66
      %s84 = sphi 0, %s84
      %s86 = sphi 0, %s84
      %s87 = sphi 0, %s86
      %s101 = sphi 0, %s87
      %s105 = sphi 0, %s105
      %s107 = sphi 0, %s105
      %s108 = sphi 0, %s107
      %s122 = sphi 0, %s108
      %s126 = sphi 0, %s126
      %s128 = sphi 0, %s126
      %s129 = sphi 0, %s128
      %s143 = sphi 0, %s129
      %s147 = sphi 0, %s147
      %s149 = sphi 0, %s147
      %s150 = sphi 0, %s149
      %s164 = sphi 0, %s150
      %s172 = sphi 0, %s174
      %s175 = sphi 0, %s172
      %s176 = sphi 0, %s175
      %s192 = sphi 0, %s176
    $region4: #{face_rotate_convolution.1} parent=1 // loop_header_branch
      %18 = sbr.rel (%p16) target = $region8
    $region5: #{face_rotate_convolution.1} parent=1 // loop_body
      %s20 = ssub.s32 %s15, 1
      %s21 = ssub.s32 %s15, 2
      %s28 = sadd.s32 1, %s23
      %p29 = scmp.ge.s32.totalorder %s28, 1
      %s30 = scalar_select %p29, 0, %s28
      %s31 = sadd.s32 1, %s22
      %s32 = scalar_select %p29, %s31, %s22
      %p33 = scmp.ge.s32.totalorder %s32, 2
      %s34 = scalar_select %p33, 0, %s32
      %s35 = ssub.s32 %s22, %s34
      %s36 = ssub.s32 %s23, %s30
      %s37 = sor.u32 %s35, %s36
      %p38 = scmp.eq.s32.totalorder %s37, 0
      %s40 = sadd.s32 %s39, 1
      %s41 = scalar_select %p38, %s39, %s40
      %p44 = pneg %p38
      %p45 = scmp.eq.s32.totalorder %s15, 1
      %p46 = por %p44, %p45
      %p47 = scmp.ne.s32.totalorder %s39, %s42
      %p48 = scmp.eq.s32.totalorder %s15, 0
      %p49 = por %p47, %p48
      %p50 = scmp.ne.s32.totalorder %s39, %s42
      %p51 = scmp.eq.s32.totalorder %s20, 1
      %p52 = por %p50, %p51
      %p53 = scmp.ne.s32.totalorder %s42, %s43
      %p54 = scmp.eq.s32.totalorder %s20, 0
      %p55 = por %p53, %p54
      %p56 = scmp.ne.s32.totalorder %s42, %s43
      %p57 = scmp.eq.s32.totalorder %s21, 1
      %p58 = por %p56, %p57
      %p60 = scmp.ne.s32.totalorder %s43, %s59
      %p61 = scmp.eq.s32.totalorder %s21, 0
      %p62 = por %p60, %p61
      %s64 = sadd.s32 %s63, 1
      %p67 = scmp.eq.s32.totalorder %s15, 1
      %p68 = scmp.ne.s32.totalorder %s63, %s65
      %p69 = scmp.eq.s32.totalorder %s15, 0
      %p70 = por %p68, %p69
      %p71 = scmp.ne.s32.totalorder %s63, %s65
      %p72 = scmp.eq.s32.totalorder %s20, 1
      %p73 = por %p71, %p72
      %p74 = scmp.ne.s32.totalorder %s65, %s66
      %p75 = scmp.eq.s32.totalorder %s20, 0
      %p76 = por %p74, %p75
      %p77 = scmp.ne.s32.totalorder %s65, %s66
      %p78 = scmp.eq.s32.totalorder %s21, 1
      %p79 = por %p77, %p78
      %p81 = scmp.ne.s32.totalorder %s66, %s80
      %p82 = scmp.eq.s32.totalorder %s21, 0
      %p83 = por %p81, %p82
      %s85 = sadd.s32 %s84, 1
      %p88 = scmp.eq.s32.totalorder %s15, 1
      %p89 = scmp.ne.s32.totalorder %s84, %s86
      %p90 = scmp.eq.s32.totalorder %s15, 0
      %p91 = por %p89, %p90
      %p92 = scmp.ne.s32.totalorder %s84, %s86
      %p93 = scmp.eq.s32.totalorder %s20, 1
      %p94 = por %p92, %p93
      %p95 = scmp.ne.s32.totalorder %s86, %s87
      %p96 = scmp.eq.s32.totalorder %s20, 0
      %p97 = por %p95, %p96
      %p98 = scmp.ne.s32.totalorder %s86, %s87
      %p99 = scmp.eq.s32.totalorder %s21, 1
      %p100 = por %p98, %p99
      %p102 = scmp.ne.s32.totalorder %s87, %s101
      %p103 = scmp.eq.s32.totalorder %s21, 0
      %p104 = por %p102, %p103
      %s106 = sadd.s32 %s105, 1
      %p109 = scmp.eq.s32.totalorder %s15, 1
      %p110 = scmp.ne.s32.totalorder %s105, %s107
      %p111 = scmp.eq.s32.totalorder %s15, 0
      %p112 = por %p110, %p111
      %p113 = scmp.ne.s32.totalorder %s105, %s107
      %p114 = scmp.eq.s32.totalorder %s20, 1
      %p115 = por %p113, %p114
      %p116 = scmp.ne.s32.totalorder %s107, %s108
      %p117 = scmp.eq.s32.totalorder %s20, 0
      %p118 = por %p116, %p117
      %p119 = scmp.ne.s32.totalorder %s107, %s108
      %p120 = scmp.eq.s32.totalorder %s21, 1
      %p121 = por %p119, %p120
      %p123 = scmp.ne.s32.totalorder %s108, %s122
      %p124 = scmp.eq.s32.totalorder %s21, 0
      %p125 = por %p123, %p124
      %s127 = sadd.s32 %s126, 1
      %p130 = scmp.eq.s32.totalorder %s15, 1
      %p131 = scmp.ne.s32.totalorder %s126, %s128
      %p132 = scmp.eq.s32.totalorder %s15, 0
      %p133 = por %p131, %p132
      %p134 = scmp.ne.s32.totalorder %s126, %s128
      %p135 = scmp.eq.s32.totalorder %s20, 1
      %p136 = por %p134, %p135
      %p137 = scmp.ne.s32.totalorder %s128, %s129
      %p138 = scmp.eq.s32.totalorder %s20, 0
      %p139 = por %p137, %p138
      %p140 = scmp.ne.s32.totalorder %s128, %s129
      %p141 = scmp.eq.s32.totalorder %s21, 1
      %p142 = por %p140, %p141
      %p144 = scmp.ne.s32.totalorder %s129, %s143
      %p145 = scmp.eq.s32.totalorder %s21, 0
      %p146 = por %p144, %p145
      %s148 = sadd.s32 %s147, 1
      %p151 = scmp.eq.s32.totalorder %s15, 1
      %p152 = scmp.ne.s32.totalorder %s147, %s149
      %p153 = scmp.eq.s32.totalorder %s15, 0
      %p154 = por %p152, %p153
      %p155 = scmp.ne.s32.totalorder %s147, %s149
      %p156 = scmp.eq.s32.totalorder %s20, 1
      %p157 = por %p155, %p156
      %p158 = scmp.ne.s32.totalorder %s149, %s150
      %p159 = scmp.eq.s32.totalorder %s20, 0
      %p160 = por %p158, %p159
      %p161 = scmp.ne.s32.totalorder %s149, %s150
      %p162 = scmp.eq.s32.totalorder %s21, 1
      %p163 = por %p161, %p162
      %p165 = scmp.ne.s32.totalorder %s150, %s164
      %p166 = scmp.eq.s32.totalorder %s21, 0
      %p167 = por %p165, %p166
      %s168 = ssub.s32 %s22, %s34
      %s169 = ssub.s32 %s23, %s30
      %s170 = sor.u32 %s168, %s169
      %p171 = scmp.eq.s32.totalorder %s170, 0
      %s173 = sadd.s32 %s172, 1
      %s174 = scalar_select %p171, %s172, %s173
      %p177 = pneg %p171
      %p178 = scmp.eq.s32.totalorder %s15, 1
      %p179 = por %p177, %p178
      %p180 = scmp.ne.s32.totalorder %s172, %s175
      %p181 = scmp.eq.s32.totalorder %s15, 0
      %p182 = por %p180, %p181
      %p183 = scmp.ne.s32.totalorder %s172, %s175
      %p184 = scmp.eq.s32.totalorder %s20, 1
      %p185 = por %p183, %p184
      %p186 = scmp.ne.s32.totalorder %s175, %s176
      %p187 = scmp.eq.s32.totalorder %s20, 0
      %p188 = por %p186, %p187
      %p189 = scmp.ne.s32.totalorder %s175, %s176
      %p190 = scmp.eq.s32.totalorder %s21, 1
      %p191 = por %p189, %p190
      %p193 = scmp.ne.s32.totalorder %s176, %s192
      %p194 = scmp.eq.s32.totalorder %s21, 0
      %p195 = por %p193, %p194
      %p196 = scmp.le.s32.totalorder 1, %s15
      %p197 = scmp.lt.s32.totalorder %s15, 3
      %p198 = pnand %p196, %p197
      %p199 = pneg %p198
      // Predicated region
      $region9: #{face_rotate_convolution.1} parent=5 // pred_check
        _
      $region10: #{face_rotate_convolution.1} parent=5 // pred_check_branch
        %201 = sbr.rel (%p198) target = $region12
      $region11: #{face_rotate_convolution.1} parent=5 // pred_region
        %s202 = ssub.s32 %s15, 1
        // Predicated region
        $region13: #{face_rotate_convolution.1} parent=11 // pred_check
          %p203 = pneg %p76
        $region14: #{face_rotate_convolution.1} parent=11 // pred_check_branch
          %205 = sbr.rel (%p203) target = $region16
        $region15: #{face_rotate_convolution.1} parent=11 // pred_region
          _
        $region16: #{face_rotate_convolution.1} parent=11 // pred_fallthru
          _
        // Predicated region
        $region17: #{face_rotate_convolution.1} parent=11 // pred_check
          %p206 = pneg %p97
        $region18: #{face_rotate_convolution.1} parent=11 // pred_check_branch
          %208 = sbr.rel (%p206) target = $region20
        $region19: #{face_rotate_convolution.1} parent=11 // pred_region
          _
        $region20: #{face_rotate_convolution.1} parent=11 // pred_fallthru
          _
        // Predicated region
        $region21: #{face_rotate_convolution.1} parent=11 // pred_check
          %p209 = pneg %p118
        $region22: #{face_rotate_convolution.1} parent=11 // pred_check_branch
          %211 = sbr.rel (%p209) target = $region24
        $region23: #{face_rotate_convolution.1} parent=11 // pred_region
          _
        $region24: #{face_rotate_convolution.1} parent=11 // pred_fallthru
          _
        // Predicated region
        $region25: #{face_rotate_convolution.1} parent=11 // pred_check
          %p212 = pneg %p139
        $region26: #{face_rotate_convolution.1} parent=11 // pred_check_branch
          %214 = sbr.rel (%p212) target = $region28
        $region27: #{face_rotate_convolution.1} parent=11 // pred_region
          _
        $region28: #{face_rotate_convolution.1} parent=11 // pred_fallthru
          _
        // Predicated region
        $region29: #{face_rotate_convolution.1} parent=11 // pred_check
          %p215 = pneg %p160
        $region30: #{face_rotate_convolution.1} parent=11 // pred_check_branch
          %217 = sbr.rel (%p215) target = $region32
        $region31: #{face_rotate_convolution.1} parent=11 // pred_region
          _
        $region32: #{face_rotate_convolution.1} parent=11 // pred_fallthru
          _
      $region12: #{face_rotate_convolution.1} parent=5 // pred_fallthru
        _
      %p218 = scmp.lt.s32.totalorder %s15, 2
      // Predicated region
      $region33: #{face_rotate_convolution.1} parent=5 // pred_check
        %p219 = pneg %p218
      $region34: #{face_rotate_convolution.1} parent=5 // pred_check_branch
        %221 = sbr.rel (%p219) target = $region36
      $region35: #{face_rotate_convolution.1} parent=5 // pred_region
        // Predicated region
        $region37: #{face_rotate_convolution.1} parent=35 // pred_check
          %p222 = pneg %p49
        $region38: #{face_rotate_convolution.1} parent=35 // pred_check_branch
          %224 = sbr.rel (%p222) target = $region40
        $region39: #{face_rotate_convolution.1} parent=35 // pred_region
          %p225 = scmp.lt.s32.totalorder %s22, 1
          %s226 = scalar_select %p225, %s22, 1
          %p227 = scmp.lt.s32.totalorder %s23, 0
          %s228 = scalar_select %p227, %s23, 0
          %s229 = smul.addr %s226, 2
          %s230 = sadd.s32 %s228, %s229
          %s231 = smul.addr %s230, 8
          %s232 = scalar_lea.vmem %s0, %s231
        $region40: #{face_rotate_convolution.1} parent=35 // pred_fallthru
          _
      $region36: #{face_rotate_convolution.1} parent=5 // pred_fallthru
        _
      %p233 = scmp.le.s32.totalorder 1, %s15
      %p234 = scmp.lt.s32.totalorder %s15, 3
      %p235 = pnand %p233, %p234
      %p236 = pneg %p235
      // Predicated region
      $region41: #{face_rotate_convolution.1} parent=5 // pred_check
        _
      $region42: #{face_rotate_convolution.1} parent=5 // pred_check_branch
        %238 = sbr.rel (%p235) target = $region44
      $region43: #{face_rotate_convolution.1} parent=5 // pred_region
        %s239 = ssub.s32 %s15, 1
        %p240 = scmp.lt.s32.totalorder %s24, 1
        %s241 = scalar_select %p240, %s24, 1
        %p242 = scmp.lt.s32.totalorder %s25, 0
        %s243 = scalar_select %p242, %s25, 0
        %s244 = smul.addr %s241, 2
        %s245 = sadd.s32 %s243, %s244
        %s246 = smul.addr %s245, 8
        %s247 = scalar_lea.vmem %s0, %s246
        %p248 = pneg %p55
        %p249 = pneg %p52
        %p250 = pneg %p76
        %p251 = pneg %p73
        %p252 = pneg %p97
        %p253 = pneg %p94
        %p254 = pneg %p118
        %p255 = pneg %p115
        %p256 = pneg %p139
        %p257 = pneg %p136
        %p258 = pneg %p160
        %p259 = pneg %p157
        %p260 = pneg %p188
        %p261 = pneg %p185
        %s262 = sand.u32 %s175, 1
        %s263 = scalar_lea.sflag [#allocation3], %s262
        %s264 = sand.u32 %s175, 1
        %s265 = smul.addr %s264, 64
        %s266 = scalar_lea.vmem [#allocation2], %s265
        %p267 = scmp.lt.s32.totalorder %s24, 1
        %s268 = scalar_select %p267, %s24, 1
        %p269 = scmp.lt.s32.totalorder %s25, 0
        %s270 = scalar_select %p269, %s25, 0
        %s271 = smul.addr %s268, 2
        %s272 = sadd.s32 %s270, %s271
        %s273 = smul.addr %s272, 8
        %s274 = scalar_lea.vmem %s0, %s273
        %v275 = vld [vmem:[%s274] sm:$0xff]
        %v276 = vld [vmem:[%s274 + $0x8] sm:$0x1]
        %v277 = vld [vmem:[%s5] sm:$0xff]
        %v278 = vld [vmem:[%s5 + $0x8] sm:$0xff]
        %v279 = vld [vmem:[%s5 + $0x10] sm:$0xff]
        %v280 = vld [vmem:[%s5 + $0x18] sm:$0xff]
        %v281 = vld [vmem:[%s5 + $0x20] sm:$0xff]
        %v282 = vld [vmem:[%s5 + $0x28] sm:$0xff]
        %v283 = vld [vmem:[%s5 + $0x30] sm:$0xff]
        %v284 = vld [vmem:[%s5 + $0x38] sm:$0xff]
        %v285 = vld [vmem:[%s5 + $0x40] sm:$0xff]
        %v286 = vld [vmem:[%s5 + $0x48] sm:$0xff]
        %v287 = vld [vmem:[%s5 + $0x50] sm:$0xff]
        %v288 = vld [vmem:[%s5 + $0x58] sm:$0xff]
        %v289 = vld [vmem:[%s1] sm:$0xff]
        %v290 = vld [vmem:[%s1 + $0x8] sm:$0xff]
        %v291 = vld [vmem:[%s1 + $0x10] sm:$0xff]
        %v292 = vld [vmem:[%s1 + $0x18] sm:$0xff]
        %v293 = vld [vmem:[%s1 + $0x20] sm:$0xff]
        %v294 = vld [vmem:[%s1 + $0x28] sm:$0xff]
        %v295 = vld [vmem:[%s1 + $0x30] sm:$0xff]
        %v296 = vld [vmem:[%s1 + $0x38] sm:$0xff]
        %v297 = vld [vmem:[%s1 + $0x40] sm:$0xff]
        %v298 = vld [vmem:[%s1 + $0x48] sm:$0xff]
        %v299 = vld [vmem:[%s1 + $0x50] sm:$0xff]
        %v300 = vld [vmem:[%s1 + $0x58] sm:$0xff]
        %302 = vset.pattern.permute.xlu0 0
        %303 = vperm.xlu0 %302, %v277
        %v304 = vpop.permute.xlu0 %303
        %307 = vset.pattern.permute.xlu0 0
        %308 = vperm.xlu0 %307, %v278
        %v309 = vpop.permute.xlu0 %308
        %312 = vset.pattern.permute.xlu0 0
        %313 = vperm.xlu0 %312, %v279
        %v314 = vpop.permute.xlu0 %313
        %317 = vset.pattern.permute.xlu0 0
        %318 = vperm.xlu0 %317, %v280
        %v319 = vpop.permute.xlu0 %318
        %322 = vset.pattern.permute.xlu0 0
        %323 = vperm.xlu0 %322, %v281
        %v324 = vpop.permute.xlu0 %323
        %327 = vset.pattern.permute.xlu0 0
        %328 = vperm.xlu0 %327, %v282
        %v329 = vpop.permute.xlu0 %328
        %332 = vset.pattern.permute.xlu0 0
        %333 = vperm.xlu0 %332, %v283
        %v334 = vpop.permute.xlu0 %333
        %337 = vset.pattern.permute.xlu0 0
        %338 = vperm.xlu0 %337, %v284
        %v339 = vpop.permute.xlu0 %338
        %342 = vset.pattern.permute.xlu0 0
        %343 = vperm.xlu0 %342, %v285
        %v344 = vpop.permute.xlu0 %343
        %347 = vset.pattern.permute.xlu0 0
        %348 = vperm.xlu0 %347, %v286
        %v349 = vpop.permute.xlu0 %348
        %352 = vset.pattern.permute.xlu0 0
        %353 = vperm.xlu0 %352, %v287
        %v354 = vpop.permute.xlu0 %353
        %357 = vset.pattern.permute.xlu0 0
        %358 = vperm.xlu0 %357, %v288
        %v359 = vpop.permute.xlu0 %358
        %vm361 = vcmask 72704
        %v363 = vsel %vm361, %v289, 0
        %v366 = vsel %vm361, %v290, 0
        %v369 = vsel %vm361, %v291, 0
        %v372 = vsel %vm361, %v292, 0
        %v375 = vsel %vm361, %v293, 0
        %v378 = vsel %vm361, %v294, 0
        %v381 = vsel %vm361, %v295, 0
        %v384 = vsel %vm361, %v296, 0
        %v387 = vsel %vm361, %v297, 0
        %v390 = vsel %vm361, %v298, 0
        %v393 = vsel %vm361, %v299, 0
        %v396 = vsel %vm361, %v300, 0
        %vm398 = vcmask 1040384
        %v400 = vsel %vm398, %v276, 0
        %402 = vmatprep.subr.mxu0 0.0
        %403 = vmatpush1.msra.mxu0 0.0
        %404 = vmatprep.subr.mxu0 0.0
        %405 = vmatpush1.msra.mxu0 0.0
        %406 = vmatprep.subr.mxu0 0.0
        %407 = vmatpush1.msra.mxu0 0.0
        %408 = vmatprep.subr.mxu0 0.0
        %409 = vmatpush1.msra.mxu0 0.0
        %410 = vmatprep.subr.mxu0 0.0
        %411 = vmatpush1.msra.mxu0 0.0
        %412 = vmatprep.subr.mxu0 0.0
        %413 = vmatpush1.msra.mxu0 0.0
        %414 = vmatprep.subr.mxu0 0.0
        %415 = vmatpush1.msra.mxu0 0.0
        %416 = vmatprep.subr.mxu0 0.0
        %417 = vmatpush1.msra.mxu0 0.0
        %418 = vmatprep.subr.mxu0 0.0
        %419 = vmatpush1.msra.mxu0 0.0
        %420 = vmatprep.subr.mxu0 0.0
        %421 = vmatpush1.msra.mxu0 0.0
        %422 = vmatprep.subr.mxu0 0.0
        %423 = vmatpush1.msra.mxu0 0.0
        %424 = vmatprep.subr.mxu0 0.0
        %425 = vmatpush1.msra.mxu0 0.0
        %426 = vmatprep.subr.mxu0 0.0
        %427 = vmatpush1.msra.mxu0 0.0
        %428 = vmatprep.subr.mxu0 0.0
        %429 = vmatpush1.msra.mxu0 0.0
        %430 = vmatprep.subr.mxu0 0.0
        %431 = vmatpush1.msra.mxu0 %v400
        %432 = vmatprep.subr.mxu0 0.0
        %433 = vmatpush1.msra.mxu0 %v275
        %434 = vmatprep.subr.mxu0 0.0
        %435 = vmatpush2.msra.mxu0 0.0
        %436 = vmatprep.subr.mxu0 0.0
        %437 = vmatpush2.msra.mxu0 0.0
        %438 = vmatprep.subr.mxu0 0.0
        %439 = vmatpush2.msra.mxu0 0.0
        %440 = vmatprep.subr.mxu0 0.0
        %441 = vmatpush2.msra.mxu0 0.0
        %442 = vmatprep.subr.mxu0 0.0
        %443 = vmatpush2.msra.mxu0 0.0
        %444 = vmatprep.subr.mxu0 0.0
        %445 = vmatpush2.msra.mxu0 0.0
        %446 = vmatprep.subr.mxu0 0.0
        %447 = vmatpush2.msra.mxu0 0.0
        %448 = vmatprep.subr.mxu0 0.0
        %449 = vmatpush2.msra.mxu0 0.0
        %450 = vmatprep.subr.mxu0 0.0
        %451 = vmatpush2.msra.mxu0 0.0
        %452 = vmatprep.subr.mxu0 0.0
        %453 = vmatpush2.msra.mxu0 0.0
        %454 = vmatprep.subr.mxu0 0.0
        %455 = vmatpush2.msra.mxu0 0.0
        %456 = vmatprep.subr.mxu0 0.0
        %457 = vmatpush2.msra.mxu0 0.0
        %458 = vmatprep.subr.mxu0 0.0
        %459 = vmatpush2.msra.mxu0 0.0
        %460 = vmatprep.subr.mxu0 0.0
        %461 = vmatpush2.msra.mxu0 0.0
        %462 = vmatprep.subr.mxu0 0.0
        %463 = vmatpush2.msra.mxu0 0.0
        %464 = vmatprep.subr.mxu0 0.0
        %465 = vmatpush2.msra.mxu0 0.0
        %466 = vmatprep.mubr.f32.mxu0 0.0
        %467 = vmatmul.mubr.f32.gmra.mxu0 %v363
        %v468 = vpop.f32.mrf.mxu0
        %v469 = vadd.f32 %v304, %v468
        %v470 = vpop.f32.mrf.mxu0
        %471 = vmatprep.mubr.f32.mxu0 0.0
        %472 = vmatmul.mubr.f32.gmra.mxu0 %v366
        %v473 = vpop.f32.mrf.mxu0
        %v474 = vadd.f32 %v309, %v473
        %v475 = vpop.f32.mrf.mxu0
        %476 = vmatprep.mubr.f32.mxu0 0.0
        %477 = vmatmul.mubr.f32.gmra.mxu0 %v369
        %v478 = vpop.f32.mrf.mxu0
        %v479 = vadd.f32 %v314, %v478
        %v480 = vpop.f32.mrf.mxu0
        %481 = vmatprep.mubr.f32.mxu0 0.0
        %482 = vmatmul.mubr.f32.gmra.mxu0 %v372
        %v483 = vpop.f32.mrf.mxu0
        %v484 = vadd.f32 %v319, %v483
        %v485 = vpop.f32.mrf.mxu0
        %486 = vmatprep.mubr.f32.mxu0 0.0
        %487 = vmatmul.mubr.f32.gmra.mxu0 %v375
        %v488 = vpop.f32.mrf.mxu0
        %v489 = vadd.f32 %v324, %v488
        %v490 = vpop.f32.mrf.mxu0
        %491 = vmatprep.mubr.f32.mxu0 0.0
        %492 = vmatmul.mubr.f32.gmra.mxu0 %v378
        %v493 = vpop.f32.mrf.mxu0
        %v494 = vadd.f32 %v329, %v493
        %v495 = vpop.f32.mrf.mxu0
        %496 = vmatprep.mubr.f32.mxu0 0.0
        %497 = vmatmul.mubr.f32.gmra.mxu0 %v381
        %v498 = vpop.f32.mrf.mxu0
        %v499 = vadd.f32 %v334, %v498
        %v500 = vpop.f32.mrf.mxu0
        %501 = vmatprep.mubr.f32.mxu0 0.0
        %502 = vmatmul.mubr.f32.gmra.mxu0 %v384
        %v503 = vpop.f32.mrf.mxu0
        %v504 = vadd.f32 %v339, %v503
        %v505 = vpop.f32.mrf.mxu0
        %506 = vmatprep.mubr.f32.mxu0 0.0
        %507 = vmatmul.mubr.f32.gmra.mxu0 %v387
        %v508 = vpop.f32.mrf.mxu0
        %v509 = vadd.f32 %v344, %v508
        %v510 = vpop.f32.mrf.mxu0
        %511 = vmatprep.mubr.f32.mxu0 0.0
        %512 = vmatmul.mubr.f32.gmra.mxu0 %v390
        %v513 = vpop.f32.mrf.mxu0
        %v514 = vadd.f32 %v349, %v513
        %v515 = vpop.f32.mrf.mxu0
        %516 = vmatprep.mubr.f32.mxu0 0.0
        %517 = vmatmul.mubr.f32.gmra.mxu0 %v393
        %v518 = vpop.f32.mrf.mxu0
        %v519 = vadd.f32 %v354, %v518
        %v520 = vpop.f32.mrf.mxu0
        %521 = vmatprep.mubr.f32.mxu0 0.0
        %522 = vmatmul.mubr.f32.gmra.mxu0 %v396
        %v523 = vpop.f32.mrf.mxu0
        %v524 = vadd.f32 %v359, %v523
        %v525 = vpop.f32.mrf.mxu0
        %526 = vdwg.mxu0
        %v527 = vmax.f32 %v469, 0.0
        %v528 = vmax.f32 %v474, 0.0
        %v529 = vmax.f32 %v479, 0.0
        %v530 = vmax.f32 %v484, 0.0
        %v531 = vmax.f32 %v489, 0.0
        %v532 = vmax.f32 %v494, 0.0
        %v533 = vmax.f32 %v499, 0.0
        %v534 = vmax.f32 %v504, 0.0
        %v535 = vmax.f32 %v509, 0.0
        %v536 = vmax.f32 %v514, 0.0
        %v537 = vmax.f32 %v519, 0.0
        %v538 = vmax.f32 %v524, 0.0
        %v539 = vld [vmem:[%s2] sm:$0xff]
        %v540 = vld [vmem:[%s2 + $0x8] sm:$0xff]
        %v541 = vld [vmem:[%s2 + $0x10] sm:$0xff]
        %v542 = vld [vmem:[%s2 + $0x18] sm:$0xff]
        %v543 = vld [vmem:[%s2 + $0x20] sm:$0xff]
        %v544 = vld [vmem:[%s2 + $0x28] sm:$0xff]
        %v545 = vld [vmem:[%s2 + $0x30] sm:$0xff]
        %v546 = vld [vmem:[%s2 + $0x38] sm:$0xff]
        %v547 = vld [vmem:[%s2 + $0x40] sm:$0xff]
        %v548 = vld [vmem:[%s2 + $0x48] sm:$0xff]
        %v549 = vld [vmem:[%s2 + $0x50] sm:$0xff]
        %v550 = vld [vmem:[%s2 + $0x58] sm:$0xff]
        %551 = vset.pattern.permute.xlu0 1
        %552 = vperm.xlu0 %551, %v277
        %v553 = vpop.permute.xlu0 %552
        %555 = vset.pattern.permute.xlu0 1
        %556 = vperm.xlu0 %555, %v278
        %v557 = vpop.permute.xlu0 %556
        %559 = vset.pattern.permute.xlu0 1
        %560 = vperm.xlu0 %559, %v279
        %v561 = vpop.permute.xlu0 %560
        %563 = vset.pattern.permute.xlu0 1
        %564 = vperm.xlu0 %563, %v280
        %v565 = vpop.permute.xlu0 %564
        %567 = vset.pattern.permute.xlu0 1
        %568 = vperm.xlu0 %567, %v281
        %v569 = vpop.permute.xlu0 %568
        %571 = vset.pattern.permute.xlu0 1
        %572 = vperm.xlu0 %571, %v282
        %v573 = vpop.permute.xlu0 %572
        %575 = vset.pattern.permute.xlu0 1
        %576 = vperm.xlu0 %575, %v283
        %v577 = vpop.permute.xlu0 %576
        %579 = vset.pattern.permute.xlu0 1
        %580 = vperm.xlu0 %579, %v284
        %v581 = vpop.permute.xlu0 %580
        %583 = vset.pattern.permute.xlu0 1
        %584 = vperm.xlu0 %583, %v285
        %v585 = vpop.permute.xlu0 %584
        %587 = vset.pattern.permute.xlu0 1
        %588 = vperm.xlu0 %587, %v286
        %v589 = vpop.permute.xlu0 %588
        %591 = vset.pattern.permute.xlu0 1
        %592 = vperm.xlu0 %591, %v287
        %v593 = vpop.permute.xlu0 %592
        %595 = vset.pattern.permute.xlu0 1
        %596 = vperm.xlu0 %595, %v288
        %v597 = vpop.permute.xlu0 %596
        %vm599 = vcmask 785408
        %v601 = vsel %vm599, %v539, 0
        %v604 = vsel %vm599, %v540, 0
        %v607 = vsel %vm599, %v541, 0
        %v610 = vsel %vm599, %v542, 0
        %v613 = vsel %vm599, %v543, 0
        %v616 = vsel %vm599, %v544, 0
        %v619 = vsel %vm599, %v545, 0
        %v622 = vsel %vm599, %v546, 0
        %v625 = vsel %vm599, %v547, 0
        %v628 = vsel %vm599, %v548, 0
        %v631 = vsel %vm599, %v549, 0
        %v634 = vsel %vm599, %v550, 0
        %636 = vmatprep.subr.mxu0 0.0
        %637 = vmatpush1.msra.mxu0 0.0
        %638 = vmatprep.subr.mxu0 0.0
        %639 = vmatpush1.msra.mxu0 0.0
        %640 = vmatprep.subr.mxu0 0.0
        %641 = vmatpush1.msra.mxu0 0.0
        %642 = vmatprep.subr.mxu0 0.0
        %643 = vmatpush1.msra.mxu0 0.0
        %644 = vmatprep.subr.mxu0 0.0
        %645 = vmatpush1.msra.mxu0 %v538
        %646 = vmatprep.subr.mxu0 0.0
        %647 = vmatpush1.msra.mxu0 %v537
        %648 = vmatprep.subr.mxu0 0.0
        %649 = vmatpush1.msra.mxu0 %v536
        %650 = vmatprep.subr.mxu0 0.0
        %651 = vmatpush1.msra.mxu0 %v535
        %652 = vmatprep.subr.mxu0 0.0
        %653 = vmatpush1.msra.mxu0 %v534
        %654 = vmatprep.subr.mxu0 0.0
        %655 = vmatpush1.msra.mxu0 %v533
        %656 = vmatprep.subr.mxu0 0.0
        %657 = vmatpush1.msra.mxu0 %v532
        %658 = vmatprep.subr.mxu0 0.0
        %659 = vmatpush1.msra.mxu0 %v531
        %660 = vmatprep.subr.mxu0 0.0
        %661 = vmatpush1.msra.mxu0 %v530
        %662 = vmatprep.subr.mxu0 0.0
        %663 = vmatpush1.msra.mxu0 %v529
        %664 = vmatprep.subr.mxu0 0.0
        %665 = vmatpush1.msra.mxu0 %v528
        %666 = vmatprep.subr.mxu0 0.0
        %667 = vmatpush1.msra.mxu0 %v527
        %668 = vmatprep.subr.mxu0 0.0
        %669 = vmatpush2.msra.mxu0 0.0
        %670 = vmatprep.subr.mxu0 0.0
        %671 = vmatpush2.msra.mxu0 0.0
        %672 = vmatprep.subr.mxu0 0.0
        %673 = vmatpush2.msra.mxu0 0.0
        %674 = vmatprep.subr.mxu0 0.0
        %675 = vmatpush2.msra.mxu0 0.0
        %676 = vmatprep.subr.mxu0 0.0
        %677 = vmatpush2.msra.mxu0 0.0
        %678 = vmatprep.subr.mxu0 0.0
        %679 = vmatpush2.msra.mxu0 0.0
        %680 = vmatprep.subr.mxu0 0.0
        %681 = vmatpush2.msra.mxu0 0.0
        %682 = vmatprep.subr.mxu0 0.0
        %683 = vmatpush2.msra.mxu0 0.0
        %684 = vmatprep.subr.mxu0 0.0
        %685 = vmatpush2.msra.mxu0 0.0
        %686 = vmatprep.subr.mxu0 0.0
        %687 = vmatpush2.msra.mxu0 0.0
        %688 = vmatprep.subr.mxu0 0.0
        %689 = vmatpush2.msra.mxu0 0.0
        %690 = vmatprep.subr.mxu0 0.0
        %691 = vmatpush2.msra.mxu0 0.0
        %692 = vmatprep.subr.mxu0 0.0
        %693 = vmatpush2.msra.mxu0 0.0
        %694 = vmatprep.subr.mxu0 0.0
        %695 = vmatpush2.msra.mxu0 0.0
        %696 = vmatprep.subr.mxu0 0.0
        %697 = vmatpush2.msra.mxu0 0.0
        %698 = vmatprep.subr.mxu0 0.0
        %699 = vmatpush2.msra.mxu0 0.0
        %700 = vmatprep.mubr.f32.mxu0 0.0
        %701 = vmatmul.mubr.f32.gmra.mxu0 %v601
        %v702 = vpop.f32.mrf.mxu0
        %v703 = vadd.f32 %v553, %v702
        %v704 = vpop.f32.mrf.mxu0
        %705 = vmatprep.mubr.f32.mxu0 0.0
        %706 = vmatmul.mubr.f32.gmra.mxu0 %v604
        %v707 = vpop.f32.mrf.mxu0
        %v708 = vadd.f32 %v557, %v707
        %v709 = vpop.f32.mrf.mxu0
        %710 = vmatprep.mubr.f32.mxu0 0.0
        %711 = vmatmul.mubr.f32.gmra.mxu0 %v607
        %v712 = vpop.f32.mrf.mxu0
        %v713 = vadd.f32 %v561, %v712
        %v714 = vpop.f32.mrf.mxu0
        %715 = vmatprep.mubr.f32.mxu0 0.0
        %716 = vmatmul.mubr.f32.gmra.mxu0 %v610
        %v717 = vpop.f32.mrf.mxu0
        %v718 = vadd.f32 %v565, %v717
        %v719 = vpop.f32.mrf.mxu0
        %720 = vmatprep.mubr.f32.mxu0 0.0
        %721 = vmatmul.mubr.f32.gmra.mxu0 %v613
        %v722 = vpop.f32.mrf.mxu0
        %v723 = vadd.f32 %v569, %v722
        %v724 = vpop.f32.mrf.mxu0
        %725 = vmatprep.mubr.f32.mxu0 0.0
        %726 = vmatmul.mubr.f32.gmra.mxu0 %v616
        %v727 = vpop.f32.mrf.mxu0
        %v728 = vadd.f32 %v573, %v727
        %v729 = vpop.f32.mrf.mxu0
        %730 = vmatprep.mubr.f32.mxu0 0.0
        %731 = vmatmul.mubr.f32.gmra.mxu0 %v619
        %v732 = vpop.f32.mrf.mxu0
        %v733 = vadd.f32 %v577, %v732
        %v734 = vpop.f32.mrf.mxu0
        %735 = vmatprep.mubr.f32.mxu0 0.0
        %736 = vmatmul.mubr.f32.gmra.mxu0 %v622
        %v737 = vpop.f32.mrf.mxu0
        %v738 = vadd.f32 %v581, %v737
        %v739 = vpop.f32.mrf.mxu0
        %740 = vmatprep.mubr.f32.mxu0 0.0
        %741 = vmatmul.mubr.f32.gmra.mxu0 %v625
        %v742 = vpop.f32.mrf.mxu0
        %v743 = vadd.f32 %v585, %v742
        %v744 = vpop.f32.mrf.mxu0
        %745 = vmatprep.mubr.f32.mxu0 0.0
        %746 = vmatmul.mubr.f32.gmra.mxu0 %v628
        %v747 = vpop.f32.mrf.mxu0
        %v748 = vadd.f32 %v589, %v747
        %v749 = vpop.f32.mrf.mxu0
        %750 = vmatprep.mubr.f32.mxu0 0.0
        %751 = vmatmul.mubr.f32.gmra.mxu0 %v631
        %v752 = vpop.f32.mrf.mxu0
        %v753 = vadd.f32 %v593, %v752
        %v754 = vpop.f32.mrf.mxu0
        %755 = vmatprep.mubr.f32.mxu0 0.0
        %756 = vmatmul.mubr.f32.gmra.mxu0 %v634
        %v757 = vpop.f32.mrf.mxu0
        %v758 = vadd.f32 %v597, %v757
        %v759 = vpop.f32.mrf.mxu0
        %760 = vdwg.mxu0
        %v761 = vmax.f32 %v703, 0.0
        %v762 = vmax.f32 %v708, 0.0
        %v763 = vmax.f32 %v713, 0.0
        %v764 = vmax.f32 %v718, 0.0
        %v765 = vmax.f32 %v723, 0.0
        %v766 = vmax.f32 %v728, 0.0
        %v767 = vmax.f32 %v733, 0.0
        %v768 = vmax.f32 %v738, 0.0
        %v769 = vmax.f32 %v743, 0.0
        %v770 = vmax.f32 %v748, 0.0
        %v771 = vmax.f32 %v753, 0.0
        %v772 = vmax.f32 %v758, 0.0
        %v773 = vld [vmem:[%s3] sm:$0xff]
        %v774 = vld [vmem:[%s3 + $0x8] sm:$0xff]
        %v775 = vld [vmem:[%s3 + $0x10] sm:$0xff]
        %v776 = vld [vmem:[%s3 + $0x18] sm:$0xff]
        %v777 = vld [vmem:[%s3 + $0x20] sm:$0xff]
        %v778 = vld [vmem:[%s3 + $0x28] sm:$0xff]
        %v779 = vld [vmem:[%s3 + $0x30] sm:$0xff]
        %v780 = vld [vmem:[%s3 + $0x38] sm:$0xff]
        %781 = vset.pattern.permute.xlu0 2
        %782 = vperm.xlu0 %781, %v277
        %v783 = vpop.permute.xlu0 %782
        %785 = vset.pattern.permute.xlu0 2
        %786 = vperm.xlu0 %785, %v278
        %v787 = vpop.permute.xlu0 %786
        %789 = vset.pattern.permute.xlu0 2
        %790 = vperm.xlu0 %789, %v279
        %v791 = vpop.permute.xlu0 %790
        %793 = vset.pattern.permute.xlu0 2
        %794 = vperm.xlu0 %793, %v280
        %v795 = vpop.permute.xlu0 %794
        %797 = vset.pattern.permute.xlu0 2
        %798 = vperm.xlu0 %797, %v281
        %v799 = vpop.permute.xlu0 %798
        %801 = vset.pattern.permute.xlu0 2
        %802 = vperm.xlu0 %801, %v282
        %v803 = vpop.permute.xlu0 %802
        %805 = vset.pattern.permute.xlu0 2
        %806 = vperm.xlu0 %805, %v283
        %v807 = vpop.permute.xlu0 %806
        %809 = vset.pattern.permute.xlu0 2
        %810 = vperm.xlu0 %809, %v284
        %v811 = vpop.permute.xlu0 %810
        %v814 = vsel %vm599, %v773, 0
        %v817 = vsel %vm599, %v774, 0
        %v820 = vsel %vm599, %v775, 0
        %v823 = vsel %vm599, %v776, 0
        %v826 = vsel %vm599, %v777, 0
        %v829 = vsel %vm599, %v778, 0
        %v832 = vsel %vm599, %v779, 0
        %v835 = vsel %vm599, %v780, 0
        %837 = vmatprep.subr.mxu0 0.0
        %838 = vmatpush1.msra.mxu0 0.0
        %839 = vmatprep.subr.mxu0 0.0
        %840 = vmatpush1.msra.mxu0 0.0
        %841 = vmatprep.subr.mxu0 0.0
        %842 = vmatpush1.msra.mxu0 0.0
        %843 = vmatprep.subr.mxu0 0.0
        %844 = vmatpush1.msra.mxu0 0.0
        %845 = vmatprep.subr.mxu0 0.0
        %846 = vmatpush1.msra.mxu0 %v772
        %847 = vmatprep.subr.mxu0 0.0
        %848 = vmatpush1.msra.mxu0 %v771
        %849 = vmatprep.subr.mxu0 0.0
        %850 = vmatpush1.msra.mxu0 %v770
        %851 = vmatprep.subr.mxu0 0.0
        %852 = vmatpush1.msra.mxu0 %v769
        %853 = vmatprep.subr.mxu0 0.0
        %854 = vmatpush1.msra.mxu0 %v768
        %855 = vmatprep.subr.mxu0 0.0
        %856 = vmatpush1.msra.mxu0 %v767
        %857 = vmatprep.subr.mxu0 0.0
        %858 = vmatpush1.msra.mxu0 %v766
        %859 = vmatprep.subr.mxu0 0.0
        %860 = vmatpush1.msra.mxu0 %v765
        %861 = vmatprep.subr.mxu0 0.0
        %862 = vmatpush1.msra.mxu0 %v764
        %863 = vmatprep.subr.mxu0 0.0
        %864 = vmatpush1.msra.mxu0 %v763
        %865 = vmatprep.subr.mxu0 0.0
        %866 = vmatpush1.msra.mxu0 %v762
        %867 = vmatprep.subr.mxu0 0.0
        %868 = vmatpush1.msra.mxu0 %v761
        %869 = vmatprep.subr.mxu0 0.0
        %870 = vmatpush2.msra.mxu0 0.0
        %871 = vmatprep.subr.mxu0 0.0
        %872 = vmatpush2.msra.mxu0 0.0
        %873 = vmatprep.subr.mxu0 0.0
        %874 = vmatpush2.msra.mxu0 0.0
        %875 = vmatprep.subr.mxu0 0.0
        %876 = vmatpush2.msra.mxu0 0.0
        %877 = vmatprep.subr.mxu0 0.0
        %878 = vmatpush2.msra.mxu0 0.0
        %879 = vmatprep.subr.mxu0 0.0
        %880 = vmatpush2.msra.mxu0 0.0
        %881 = vmatprep.subr.mxu0 0.0
        %882 = vmatpush2.msra.mxu0 0.0
        %883 = vmatprep.subr.mxu0 0.0
        %884 = vmatpush2.msra.mxu0 0.0
        %885 = vmatprep.subr.mxu0 0.0
        %886 = vmatpush2.msra.mxu0 0.0
        %887 = vmatprep.subr.mxu0 0.0
        %888 = vmatpush2.msra.mxu0 0.0
        %889 = vmatprep.subr.mxu0 0.0
        %890 = vmatpush2.msra.mxu0 0.0
        %891 = vmatprep.subr.mxu0 0.0
        %892 = vmatpush2.msra.mxu0 0.0
        %893 = vmatprep.subr.mxu0 0.0
        %894 = vmatpush2.msra.mxu0 0.0
        %895 = vmatprep.subr.mxu0 0.0
        %896 = vmatpush2.msra.mxu0 0.0
        %897 = vmatprep.subr.mxu0 0.0
        %898 = vmatpush2.msra.mxu0 0.0
        %899 = vmatprep.subr.mxu0 0.0
        %900 = vmatpush2.msra.mxu0 0.0
        %901 = vmatprep.mubr.f32.mxu0 0.0
        %902 = vmatmul.mubr.f32.gmra.mxu0 %v814
        %v903 = vpop.f32.mrf.mxu0
        %v904 = vadd.f32 %v783, %v903
        %v905 = vpop.f32.mrf.mxu0
        %906 = vmatprep.mubr.f32.mxu0 0.0
        %907 = vmatmul.mubr.f32.gmra.mxu0 %v817
        %v908 = vpop.f32.mrf.mxu0
        %v909 = vadd.f32 %v787, %v908
        %v910 = vpop.f32.mrf.mxu0
        %911 = vmatprep.mubr.f32.mxu0 0.0
        %912 = vmatmul.mubr.f32.gmra.mxu0 %v820
        %v913 = vpop.f32.mrf.mxu0
        %v914 = vadd.f32 %v791, %v913
        %v915 = vpop.f32.mrf.mxu0
        %916 = vmatprep.mubr.f32.mxu0 0.0
        %917 = vmatmul.mubr.f32.gmra.mxu0 %v823
        %v918 = vpop.f32.mrf.mxu0
        %v919 = vadd.f32 %v795, %v918
        %v920 = vpop.f32.mrf.mxu0
        %921 = vmatprep.mubr.f32.mxu0 0.0
        %922 = vmatmul.mubr.f32.gmra.mxu0 %v826
        %v923 = vpop.f32.mrf.mxu0
        %v924 = vadd.f32 %v799, %v923
        %v925 = vpop.f32.mrf.mxu0
        %926 = vmatprep.mubr.f32.mxu0 0.0
        %927 = vmatmul.mubr.f32.gmra.mxu0 %v829
        %v928 = vpop.f32.mrf.mxu0
        %v929 = vadd.f32 %v803, %v928
        %v930 = vpop.f32.mrf.mxu0
        %931 = vmatprep.mubr.f32.mxu0 0.0
        %932 = vmatmul.mubr.f32.gmra.mxu0 %v832
        %v933 = vpop.f32.mrf.mxu0
        %v934 = vadd.f32 %v807, %v933
        %v935 = vpop.f32.mrf.mxu0
        %936 = vmatprep.mubr.f32.mxu0 0.0
        %937 = vmatmul.mubr.f32.gmra.mxu0 %v835
        %v938 = vpop.f32.mrf.mxu0
        %v939 = vadd.f32 %v811, %v938
        %v940 = vpop.f32.mrf.mxu0
        %941 = vdwg.mxu0
        %v942 = vmax.f32 %v904, 0.0
        %v943 = vmax.f32 %v909, 0.0
        %v944 = vmax.f32 %v914, 0.0
        %v945 = vmax.f32 %v919, 0.0
        %v946 = vmax.f32 %v924, 0.0
        %v947 = vmax.f32 %v929, 0.0
        %v948 = vmax.f32 %v934, 0.0
        %v949 = vmax.f32 %v939, 0.0
        %v950 = vld [vmem:[%s4] sm:$0xff]
        %v951 = vld [vmem:[%s4 + $0x8] sm:$0xff]
        %v952 = vld [vmem:[%s4 + $0x10] sm:$0xff]
        %v953 = vld [vmem:[%s4 + $0x18] sm:$0xff]
        %v954 = vld [vmem:[%s4 + $0x20] sm:$0xff]
        %v955 = vld [vmem:[%s4 + $0x28] sm:$0xff]
        %v956 = vld [vmem:[%s4 + $0x30] sm:$0xff]
        %v957 = vld [vmem:[%s4 + $0x38] sm:$0xff]
        %958 = vset.pattern.permute.xlu0 3
        %959 = vperm.xlu0 %958, %v277
        %v960 = vpop.permute.xlu0 %959
        %962 = vset.pattern.permute.xlu0 3
        %963 = vperm.xlu0 %962, %v278
        %v964 = vpop.permute.xlu0 %963
        %966 = vset.pattern.permute.xlu0 3
        %967 = vperm.xlu0 %966, %v279
        %v968 = vpop.permute.xlu0 %967
        %970 = vset.pattern.permute.xlu0 3
        %971 = vperm.xlu0 %970, %v280
        %v972 = vpop.permute.xlu0 %971
        %974 = vset.pattern.permute.xlu0 3
        %975 = vperm.xlu0 %974, %v281
        %v976 = vpop.permute.xlu0 %975
        %978 = vset.pattern.permute.xlu0 3
        %979 = vperm.xlu0 %978, %v282
        %v980 = vpop.permute.xlu0 %979
        %982 = vset.pattern.permute.xlu0 3
        %983 = vperm.xlu0 %982, %v283
        %v984 = vpop.permute.xlu0 %983
        %986 = vset.pattern.permute.xlu0 3
        %987 = vperm.xlu0 %986, %v284
        %v988 = vpop.permute.xlu0 %987
        %vm990 = vcmask 523264
        %v992 = vsel %vm990, %v950, 0
        %v995 = vsel %vm990, %v951, 0
        %v998 = vsel %vm990, %v952, 0
        %v1001 = vsel %vm990, %v953, 0
        %v1004 = vsel %vm990, %v954, 0
        %v1007 = vsel %vm990, %v955, 0
        %v1010 = vsel %vm990, %v956, 0
        %v1013 = vsel %vm990, %v957, 0
        %1015 = vmatprep.subr.mxu0 0.0
        %1016 = vmatpush1.msra.mxu0 0.0
        %1017 = vmatprep.subr.mxu0 0.0
        %1018 = vmatpush1.msra.mxu0 0.0
        %1019 = vmatprep.subr.mxu0 0.0
        %1020 = vmatpush1.msra.mxu0 0.0
        %1021 = vmatprep.subr.mxu0 0.0
        %1022 = vmatpush1.msra.mxu0 0.0
        %1023 = vmatprep.subr.mxu0 0.0
        %1024 = vmatpush1.msra.mxu0 0.0
        %1025 = vmatprep.subr.mxu0 0.0
        %1026 = vmatpush1.msra.mxu0 0.0
        %1027 = vmatprep.subr.mxu0 0.0
        %1028 = vmatpush1.msra.mxu0 0.0
        %1029 = vmatprep.subr.mxu0 0.0
        %1030 = vmatpush1.msra.mxu0 0.0
        %1031 = vmatprep.subr.mxu0 0.0
        %1032 = vmatpush1.msra.mxu0 %v949
        %1033 = vmatprep.subr.mxu0 0.0
        %1034 = vmatpush1.msra.mxu0 %v948
        %1035 = vmatprep.subr.mxu0 0.0
        %1036 = vmatpush1.msra.mxu0 %v947
        %1037 = vmatprep.subr.mxu0 0.0
        %1038 = vmatpush1.msra.mxu0 %v946
        %1039 = vmatprep.subr.mxu0 0.0
        %1040 = vmatpush1.msra.mxu0 %v945
        %1041 = vmatprep.subr.mxu0 0.0
        %1042 = vmatpush1.msra.mxu0 %v944
        %1043 = vmatprep.subr.mxu0 0.0
        %1044 = vmatpush1.msra.mxu0 %v943
        %1045 = vmatprep.subr.mxu0 0.0
        %1046 = vmatpush1.msra.mxu0 %v942
        %1047 = vmatprep.subr.mxu0 0.0
        %1048 = vmatpush2.msra.mxu0 0.0
        %1049 = vmatprep.subr.mxu0 0.0
        %1050 = vmatpush2.msra.mxu0 0.0
        %1051 = vmatprep.subr.mxu0 0.0
        %1052 = vmatpush2.msra.mxu0 0.0
        %1053 = vmatprep.subr.mxu0 0.0
        %1054 = vmatpush2.msra.mxu0 0.0
        %1055 = vmatprep.subr.mxu0 0.0
        %1056 = vmatpush2.msra.mxu0 0.0
        %1057 = vmatprep.subr.mxu0 0.0
        %1058 = vmatpush2.msra.mxu0 0.0
        %1059 = vmatprep.subr.mxu0 0.0
        %1060 = vmatpush2.msra.mxu0 0.0
        %1061 = vmatprep.subr.mxu0 0.0
        %1062 = vmatpush2.msra.mxu0 0.0
        %1063 = vmatprep.subr.mxu0 0.0
        %1064 = vmatpush2.msra.mxu0 0.0
        %1065 = vmatprep.subr.mxu0 0.0
        %1066 = vmatpush2.msra.mxu0 0.0
        %1067 = vmatprep.subr.mxu0 0.0
        %1068 = vmatpush2.msra.mxu0 0.0
        %1069 = vmatprep.subr.mxu0 0.0
        %1070 = vmatpush2.msra.mxu0 0.0
        %1071 = vmatprep.subr.mxu0 0.0
        %1072 = vmatpush2.msra.mxu0 0.0
        %1073 = vmatprep.subr.mxu0 0.0
        %1074 = vmatpush2.msra.mxu0 0.0
        %1075 = vmatprep.subr.mxu0 0.0
        %1076 = vmatpush2.msra.mxu0 0.0
        %1077 = vmatprep.subr.mxu0 0.0
        %1078 = vmatpush2.msra.mxu0 0.0
        %1079 = vmatprep.mubr.f32.mxu0 0.0
        %1080 = vmatmul.mubr.f32.gmra.mxu0 %v992
        %v1081 = vpop.f32.mrf.mxu0
        %v1082 = vadd.f32 %v960, %v1081
        %v1083 = vpop.f32.mrf.mxu0
        %1084 = vmatprep.mubr.f32.mxu0 0.0
        %1085 = vmatmul.mubr.f32.gmra.mxu0 %v995
        %v1086 = vpop.f32.mrf.mxu0
        %v1087 = vadd.f32 %v964, %v1086
        %v1088 = vpop.f32.mrf.mxu0
        %1089 = vmatprep.mubr.f32.mxu0 0.0
        %1090 = vmatmul.mubr.f32.gmra.mxu0 %v998
        %v1091 = vpop.f32.mrf.mxu0
        %v1092 = vadd.f32 %v968, %v1091
        %v1093 = vpop.f32.mrf.mxu0
        %1094 = vmatprep.mubr.f32.mxu0 0.0
        %1095 = vmatmul.mubr.f32.gmra.mxu0 %v1001
        %v1096 = vpop.f32.mrf.mxu0
        %v1097 = vadd.f32 %v972, %v1096
        %v1098 = vpop.f32.mrf.mxu0
        %1099 = vmatprep.mubr.f32.mxu0 0.0
        %1100 = vmatmul.mubr.f32.gmra.mxu0 %v1004
        %v1101 = vpop.f32.mrf.mxu0
        %v1102 = vadd.f32 %v976, %v1101
        %v1103 = vpop.f32.mrf.mxu0
        %1104 = vmatprep.mubr.f32.mxu0 0.0
        %1105 = vmatmul.mubr.f32.gmra.mxu0 %v1007
        %v1106 = vpop.f32.mrf.mxu0
        %v1107 = vadd.f32 %v980, %v1106
        %v1108 = vpop.f32.mrf.mxu0
        %1109 = vmatprep.mubr.f32.mxu0 0.0
        %1110 = vmatmul.mubr.f32.gmra.mxu0 %v1010
        %v1111 = vpop.f32.mrf.mxu0
        %v1112 = vadd.f32 %v984, %v1111
        %v1113 = vpop.f32.mrf.mxu0
        %1114 = vmatprep.mubr.f32.mxu0 0.0
        %1115 = vmatmul.mubr.f32.gmra.mxu0 %v1013
        %v1116 = vpop.f32.mrf.mxu0
        %v1117 = vadd.f32 %v988, %v1116
        %v1118 = vpop.f32.mrf.mxu0
        %1119 = vdwg.mxu0
        %v1120 = vmax.f32 %v1082, 0.0
        %v1121 = vmax.f32 %v1087, 0.0
        %v1122 = vmax.f32 %v1092, 0.0
        %v1123 = vmax.f32 %v1097, 0.0
        %v1124 = vmax.f32 %v1102, 0.0
        %v1125 = vmax.f32 %v1107, 0.0
        %v1126 = vmax.f32 %v1112, 0.0
        %v1127 = vmax.f32 %v1117, 0.0
        %1128 = vst [vmem:[%s266] sm:$0xff] %v1120
        %1129 = vst [vmem:[%s266 + $0x8] sm:$0xff] %v1121
        %1130 = vst [vmem:[%s266 + $0x10] sm:$0xff] %v1122
        %1131 = vst [vmem:[%s266 + $0x18] sm:$0xff] %v1123
        %1132 = vst [vmem:[%s266 + $0x20] sm:$0xff] %v1124
        %1133 = vst [vmem:[%s266 + $0x28] sm:$0xff] %v1125
        %1134 = vst [vmem:[%s266 + $0x30] sm:$0xff] %v1126
        %1135 = vst [vmem:[%s266 + $0x38] sm:$0xff] %v1127
        %s1136 = sand.u32 %s175, 1
        %s1137 = scalar_lea.sflag [#allocation3], %s1136
        %s1138 = sand.u32 %s175, 1
        %s1139 = smul.addr %s1138, 64
        %s1140 = scalar_lea.vmem [#allocation2], %s1139
        // Predicated region
        $region45: #{face_rotate_convolution.1} parent=43 // pred_check
          %p1141 = pneg %p185
        $region46: #{face_rotate_convolution.1} parent=43 // pred_check_branch
          %1143 = sbr.rel (%p1141) target = $region48
        $region47: #{face_rotate_convolution.1} parent=43 // pred_region
          %s1145 = ssub.s32 1024, 1024
          %1146 = vsyncadd %s1137, %s1145
          %s1147 = smul.addr %s24, 8
          %s1148 = sadd.s32 %s25, %s1147
          %s1149 = smul.addr %s1148, 128
          %s1150 = scalar_lea.hbm %s6, %s1149
          %s1151 = sshll.u32 %s1140, 4
          %s1152 = int_to_ptr.vmem [resolvable:$true] %s1151
          %1157 = dma.vmem_to_hbm [thread:$0]  %s1152, 1024, %s1150, %s1137, 128, 128, 8
        $region48: #{face_rotate_convolution.1} parent=43 // pred_fallthru
          _
      $region44: #{face_rotate_convolution.1} parent=5 // pred_fallthru
        _
      %p1158 = scmp.le.s32.totalorder 2, %s15
      // Predicated region
      $region49: #{face_rotate_convolution.1} parent=5 // pred_check
        %p1159 = pneg %p1158
      $region50: #{face_rotate_convolution.1} parent=5 // pred_check_branch
        %1161 = sbr.rel (%p1159) target = $region52
      $region51: #{face_rotate_convolution.1} parent=5 // pred_region
        %s1162 = ssub.s32 %s15, 2
        // Predicated region
        $region53: #{face_rotate_convolution.1} parent=51 // pred_check
          %p1163 = pneg %p191
        $region54: #{face_rotate_convolution.1} parent=51 // pred_check_branch
          %1165 = sbr.rel (%p1163) target = $region56
        $region55: #{face_rotate_convolution.1} parent=51 // pred_region
          %s1166 = sand.u32 %s176, 1
          %s1167 = scalar_lea.sflag [#allocation3], %s1166
          %s1168 = sand.u32 %s176, 1
          %s1169 = smul.addr %s1168, 64
          %s1170 = scalar_lea.vmem [#allocation2], %s1169
          %1171 = dma.done %s1167, 1024
        $region56: #{face_rotate_convolution.1} parent=51 // pred_fallthru
          _
      $region52: #{face_rotate_convolution.1} parent=5 // pred_fallthru
        _
    $region6: #{face_rotate_convolution.1} parent=1 // loop_footer
      %s19 = sadd.s32 1, %s15
    $region7: #{face_rotate_convolution.1} parent=1 // loop_footer_branch
      %14 = sbr.rel target = $region3
    $region8: #{face_rotate_convolution.1} parent=1 // loop_exit
      _
    %1172 = vsyncpa [#allocation3], 1
    %s1173 = scalar_lea.sflag [#allocation3], 1
    %1174 = vsyncpa %s1173, 1

</llo_original>
